<compile_context>
chip_gen: v7x
topology: tpu7x:2x2x1
jax: 0.10.0
libtpu: 0.0.40
codegen_flags: <defaults>
</compile_context>

<pallas_src>
import functools

import jax
import jax.numpy as jnp
import numpy as np
from jax import lax
from jax.experimental import pallas as pl
from jax.experimental.pallas import tpu as pltpu

OBSERVATION_SIZE = 4
HIDDEN = 64
OUTPUT_SIZE = 9

CHUNK = 256      # in-kernel lane sub-chunk: (64, 256) f32 activation = 16 vregs
MIN_TILE = 256   # multiple of 256 -> fills v6e/v7x 256-wide MXU; 128-aligned for v5e
MAX_TILE = 4096  # cap keeps per-step VMEM tiny even on v7x (64 MiB VMEM)


def _round_up(n, m):
    return ((n + m - 1) // m) * m


def _choose_tile(B):
    """Pick a lane-dense batch tile: big tiles for large B, >=2 tiles when possible."""
    if B <= MIN_TILE:
        return MIN_TILE
    # Aim for at least 2 grid steps (v7x megacore) while keeping tiles fat.
    half = _round_up((B + 1) // 2, MIN_TILE)
    return max(MIN_TILE, min(half, MAX_TILE))


def _net3_kernel(x_ref,
                 w1_ref, b1_ref,
                 w2_ref, b2_ref,
                 w3_ref, b3_ref,
                 w4_ref, b4_ref,
                 o_ref):
    # x_ref : (OBSERVATION_SIZE, TB)      batch on lanes
    # wN    : (out_features, in_features) PyTorch layout, used as-is
    # bN    : (out_features, 1)           broadcast across lanes
    # o_ref : (OUTPUT_SIZE, TB)
    w1 = w1_ref[...]
    b1 = b1_ref[...]
    w2 = w2_ref[...]
    b2 = b2_ref[...]
    w3 = w3_ref[...]
    b3 = b3_ref[...]
    w4 = w4_ref[...]
    b4 = b4_ref[...]

    tb = x_ref.shape[-1]
    n_chunks = tb // CHUNK  # tb is always a multiple of CHUNK

    def body(c, carry):
        col = pl.multiple_of(c * CHUNK, CHUNK)
        xt = x_ref[:, pl.ds(col, CHUNK)]

        h = jnp.dot(w1, xt, preferred_element_type=jnp.float32) + b1
        h = jnp.maximum(h, 0.0)
        h = jnp.dot(w2, h, preferred_element_type=jnp.float32) + b2
        h = jnp.maximum(h, 0.0)
        h = jnp.dot(w3, h, preferred_element_type=jnp.float32) + b3
        h = jnp.maximum(h, 0.0)
        out = jnp.dot(w4, h, preferred_element_type=jnp.float32) + b4

        o_ref[:, pl.ds(col, CHUNK)] = out.astype(o_ref.dtype)
        return carry

    lax.fori_loop(0, n_chunks, body, None, unroll=True)


@functools.partial(jax.jit, static_argnames=("tb",))
def net3_forward(x, params, *, tb=None):
    """Forward pass of Net_3.

    x      : (B, OBSERVATION_SIZE) float32
    params : dict with PyTorch-shaped tensors:
             w1 (64,4) b1 (64,)  w2 (64,64) b2 (64,)
             w3 (64,64) b3 (64,) w4 (9,64)  b4 (9,)
    Returns  (B, OUTPUT_SIZE) float32.
    """
    B = x.shape[0]

    if tb is None:
        tb = _choose_tile(B)
    else:
        tb = max(MIN_TILE, _round_up(min(tb, MAX_TILE), MIN_TILE))
    assert tb % CHUNK == 0
    n_tiles = (B + tb - 1) // tb  # ragged last block masked by Pallas

    # Batch-on-lanes; no explicit padding/copy of the tail.
    xt = x.T  # (OBSERVATION_SIZE, B)

    w1, w2, w3, w4 = params["w1"], params["w2"], params["w3"], params["w4"]
    b1 = params["b1"].reshape(HIDDEN, 1)
    b2 = params["b2"].reshape(HIDDEN, 1)
    b3 = params["b3"].reshape(HIDDEN, 1)
    b4 = params["b4"].reshape(OUTPUT_SIZE, 1)

    def const_spec(a):
        # Full-array block, constant block index -> VMEM-resident across tiles.
        return pl.BlockSpec(a.shape, lambda i: (0, 0))

    in_specs = [
        pl.BlockSpec((OBSERVATION_SIZE, tb), lambda i: (0, i)),  # x tile
        const_spec(w1), const_spec(b1),
        const_spec(w2), const_spec(b2),
        const_spec(w3), const_spec(b3),
        const_spec(w4), const_spec(b4),
    ]
    out_spec = pl.BlockSpec((OUTPUT_SIZE, tb), lambda i: (0, i))

    weight_bytes = 4 * (OBSERVATION_SIZE * HIDDEN + 2 * HIDDEN * HIDDEN
                        + HIDDEN * OUTPUT_SIZE + 3 * HIDDEN + OUTPUT_SIZE)
    cost = pl.CostEstimate(
        flops=2 * B * (OBSERVATION_SIZE * HIDDEN + 2 * HIDDEN * HIDDEN
                       + HIDDEN * OUTPUT_SIZE),
        transcendentals=0,
        bytes_accessed=4 * B * (OBSERVATION_SIZE + OUTPUT_SIZE) + weight_bytes,
    )

    out_t = pl.pallas_call(
        _net3_kernel,
        out_shape=jax.ShapeDtypeStruct((OUTPUT_SIZE, B), jnp.float32),
        grid=(n_tiles,),
        in_specs=in_specs,
        out_specs=out_spec,
        compiler_params=pltpu.CompilerParams(
            dimension_semantics=("parallel",),          # shard batch tiles across TCs
            vmem_limit_bytes=32 * 1024 * 1024,          # safe headroom on all chips
        ),
        cost_estimate=cost,
    )(xt, w1, b1, w2, b2, w3, b3, w4, b4)

    # (OUTPUT_SIZE, B) -> (B, OUTPUT_SIZE); fused into the same jit dispatch.
    return out_t.T


def init_params(key):
    """Deterministic init mimicking nn.Linear's U(-1/sqrt(fan_in), 1/sqrt(fan_in)).

    Weights stored in PyTorch layout: (out_features, in_features); biases (out_features,).
    """
    dims = [(HIDDEN, OBSERVATION_SIZE), (HIDDEN, HIDDEN),
            (HIDDEN, HIDDEN), (OUTPUT_SIZE, HIDDEN)]
    params = {}
    keys = jax.random.split(key, 2 * len(dims))
    for i, (fan_out, fan_in) in enumerate(dims):
        bound = 1.0 / np.sqrt(fan_in)
        params[f"w{i + 1}"] = jax.random.uniform(
            keys[2 * i], (fan_out, fan_in), minval=-bound, maxval=bound,
            dtype=jnp.float32)
        params[f"b{i + 1}"] = jax.random.uniform(
            keys[2 * i + 1], (fan_out,), minval=-bound, maxval=bound,
            dtype=jnp.float32)
    return params


def net3_reference(x, params):
    h = jnp.maximum(x @ params["w1"].T + params["b1"], 0.0)
    h = jnp.maximum(h @ params["w2"].T + params["b2"], 0.0)
    h = jnp.maximum(h @ params["w3"].T + params["b3"], 0.0)
    return h @ params["w4"].T + params["b4"]


if __name__ == "__main__":
    key = jax.random.PRNGKey(0)
    pkey, xkey1, xkey2 = jax.random.split(key, 3)

    params = init_params(pkey)

    # Small batch (matches the DQN use-case); exercises the single ragged tile path.
    B_small = 8
    x_small = jax.random.normal(xkey1, (B_small, OBSERVATION_SIZE), dtype=jnp.float32)
    out_small = jax.block_until_ready(net3_forward(x_small, params))
    ref_small = net3_reference(x_small, params)
    np.testing.assert_allclose(np.asarray(out_small), np.asarray(ref_small),
                               rtol=1e-4, atol=1e-4)
    assert out_small.shape == (B_small, OUTPUT_SIZE)

    # Larger, non-tile-aligned batch; exercises multi-tile grid + ragged tail + chunk loop.
    B_big = 1000
    x_big = jax.random.normal(xkey2, (B_big, OBSERVATION_SIZE), dtype=jnp.float32)
    out_big = jax.block_until_ready(net3_forward(x_big, params))
    ref_big = net3_reference(x_big, params)
    np.testing.assert_allclose(np.asarray(out_big), np.asarray(ref_big),
                               rtol=1e-4, atol=1e-4)
    assert out_big.shape == (B_big, OUTPUT_SIZE)

    print("KERNEL_OK")
</pallas_src>

<mosaic_0001>
module attributes {stable_mosaic.version = 11 : i64} {
  func.func @_net3_kernel(%arg0: i32, %arg1: memref<4x256xf32, #tpu.memory_space<vmem>>, %arg2: memref<64x4xf32, #tpu.memory_space<vmem>>, %arg3: memref<64x1xf32, #tpu.memory_space<vmem>>, %arg4: memref<64x64xf32, #tpu.memory_space<vmem>>, %arg5: memref<64x1xf32, #tpu.memory_space<vmem>>, %arg6: memref<64x64xf32, #tpu.memory_space<vmem>>, %arg7: memref<64x1xf32, #tpu.memory_space<vmem>>, %arg8: memref<9x64xf32, #tpu.memory_space<vmem>>, %arg9: memref<9x1xf32, #tpu.memory_space<vmem>>, %arg10: memref<9x256xf32, #tpu.memory_space<vmem>>) attributes {dimension_semantics = [#tpu.dimension_semantics<parallel>], iteration_bounds = array<i64: 1>, scalar_prefetch = 0 : i64, scratch_operands = 0 : i64, tpu.core_type = #tpu.core_type<tc>, window_params = [{transform_indices = @transform_0, window_bounds = array<i64: 4, 256>}, {pipeline_mode = #tpu.pipeline_mode<synchronous>, transform_indices = @transform_1, window_bounds = array<i64: 64, 4>}, {pipeline_mode = #tpu.pipeline_mode<synchronous>, transform_indices = @transform_2, window_bounds = array<i64: 64, 1>}, {pipeline_mode = #tpu.pipeline_mode<synchronous>, transform_indices = @transform_3, window_bounds = array<i64: 64, 64>}, {pipeline_mode = #tpu.pipeline_mode<synchronous>, transform_indices = @transform_4, window_bounds = array<i64: 64, 1>}, {pipeline_mode = #tpu.pipeline_mode<synchronous>, transform_indices = @transform_5, window_bounds = array<i64: 64, 64>}, {pipeline_mode = #tpu.pipeline_mode<synchronous>, transform_indices = @transform_6, window_bounds = array<i64: 64, 1>}, {pipeline_mode = #tpu.pipeline_mode<synchronous>, transform_indices = @transform_7, window_bounds = array<i64: 9, 64>}, {pipeline_mode = #tpu.pipeline_mode<synchronous>, transform_indices = @transform_8, window_bounds = array<i64: 9, 1>}, {transform_indices = @transform_9, window_bounds = array<i64: 9, 256>}]} {
    %c0 = arith.constant 0 : index
    %c0_0 = arith.constant 0 : index
    %0 = vector.load %arg2[%c0, %c0_0] : memref<64x4xf32, #tpu.memory_space<vmem>>, vector<64x4xf32>
    %c0_1 = arith.constant 0 : index
    %c0_2 = arith.constant 0 : index
    %1 = vector.load %arg3[%c0_1, %c0_2] : memref<64x1xf32, #tpu.memory_space<vmem>>, vector<64x1xf32>
    %c0_3 = arith.constant 0 : index
    %c0_4 = arith.constant 0 : index
    %2 = vector.load %arg4[%c0_3, %c0_4] : memref<64x64xf32, #tpu.memory_space<vmem>>, vector<64x64xf32>
    %c0_5 = arith.constant 0 : index
    %c0_6 = arith.constant 0 : index
    %3 = vector.load %arg5[%c0_5, %c0_6] : memref<64x1xf32, #tpu.memory_space<vmem>>, vector<64x1xf32>
    %c0_7 = arith.constant 0 : index
    %c0_8 = arith.constant 0 : index
    %4 = vector.load %arg6[%c0_7, %c0_8] : memref<64x64xf32, #tpu.memory_space<vmem>>, vector<64x64xf32>
    %c0_9 = arith.constant 0 : index
    %c0_10 = arith.constant 0 : index
    %5 = vector.load %arg7[%c0_9, %c0_10] : memref<64x1xf32, #tpu.memory_space<vmem>>, vector<64x1xf32>
    %c0_11 = arith.constant 0 : index
    %c0_12 = arith.constant 0 : index
    %6 = vector.load %arg8[%c0_11, %c0_12] : memref<9x64xf32, #tpu.memory_space<vmem>>, vector<9x64xf32>
    %c0_13 = arith.constant 0 : index
    %c0_14 = arith.constant 0 : index
    %7 = vector.load %arg9[%c0_13, %c0_14] : memref<9x1xf32, #tpu.memory_space<vmem>>, vector<9x1xf32>
    %c0_i32 = arith.constant 0 : i32
    %c256_i32 = arith.constant 256 : i32
    %8 = arith.muli %c0_i32, %c256_i32 : i32
    %9 = tpu.assume_multiple %8, 256 : i32
    %c0_15 = arith.constant 0 : index
    %10 = arith.index_cast %9 : i32 to index
    %11 = vector.load %arg1[%c0_15, %10] : memref<4x256xf32, #tpu.memory_space<vmem>>, vector<4x256xf32>
    %cst = arith.constant dense<0.000000e+00> : vector<64x256xf32>
    %12 = tpu.matmul %0, %11, %cst {dimension_numbers = #tpu.dot_dimension_numbers<[1], [0], [0], [1], [0, 0, 1, 1], [], []>} : vector<64x4xf32>, vector<4x256xf32>, vector<64x256xf32> -> vector<64x256xf32>
    %13 = vector.broadcast %1 : vector<64x1xf32> to vector<64x256xf32>
    %14 = arith.addf %12, %13 : vector<64x256xf32>
    %cst_16 = arith.constant 0.000000e+00 : f32
    %15 = vector.broadcast %cst_16 : f32 to vector<64x256xf32>
    %16 = arith.maximumf %14, %15 : vector<64x256xf32>
    %cst_17 = arith.constant dense<0.000000e+00> : vector<64x256xf32>
    %17 = tpu.matmul %2, %16, %cst_17 {dimension_numbers = #tpu.dot_dimension_numbers<[1], [0], [0], [1], [0, 0, 1, 1], [], []>} : vector<64x64xf32>, vector<64x256xf32>, vector<64x256xf32> -> vector<64x256xf32>
    %18 = vector.broadcast %3 : vector<64x1xf32> to vector<64x256xf32>
    %19 = arith.addf %17, %18 : vector<64x256xf32>
    %cst_18 = arith.constant 0.000000e+00 : f32
    %20 = vector.broadcast %cst_18 : f32 to vector<64x256xf32>
    %21 = arith.maximumf %19, %20 : vector<64x256xf32>
    %cst_19 = arith.constant dense<0.000000e+00> : vector<64x256xf32>
    %22 = tpu.matmul %4, %21, %cst_19 {dimension_numbers = #tpu.dot_dimension_numbers<[1], [0], [0], [1], [0, 0, 1, 1], [], []>} : vector<64x64xf32>, vector<64x256xf32>, vector<64x256xf32> -> vector<64x256xf32>
    %23 = vector.broadcast %5 : vector<64x1xf32> to vector<64x256xf32>
    %24 = arith.addf %22, %23 : vector<64x256xf32>
    %cst_20 = arith.constant 0.000000e+00 : f32
    %25 = vector.broadcast %cst_20 : f32 to vector<64x256xf32>
    %26 = arith.maximumf %24, %25 : vector<64x256xf32>
    %cst_21 = arith.constant dense<0.000000e+00> : vector<9x256xf32>
    %27 = tpu.matmul %6, %26, %cst_21 {dimension_numbers = #tpu.dot_dimension_numbers<[1], [0], [0], [1], [0, 0, 1, 1], [], []>} : vector<9x64xf32>, vector<64x256xf32>, vector<9x256xf32> -> vector<9x256xf32>
    %28 = vector.broadcast %7 : vector<9x1xf32> to vector<9x256xf32>
    %29 = arith.addf %27, %28 : vector<9x256xf32>
    %c0_22 = arith.constant 0 : index
    %30 = arith.index_cast %9 : i32 to index
    %31 = vector.load %arg10[%c0_22, %30] : memref<9x256xf32, #tpu.memory_space<vmem>>, vector<9x256xf32>
    tpu.vector_store %arg10[%c0_22, %30], %29 {strides = array<i32>} : memref<9x256xf32, #tpu.memory_space<vmem>>, vector<9x256xf32>,
    %c1_i32 = arith.constant 1 : i32
    return
  }
  func.func @transform_0(%arg0: i32) -> (i32, i32) {
    %c0_i32 = arith.constant 0 : i32
    %c0_i32_0 = arith.constant 0 : i32
    return %c0_i32, %arg0 : i32, i32
  }
  func.func @transform_1(%arg0: i32) -> (i32, i32) {
    %c0_i32 = arith.constant 0 : i32
    %c0_i32_0 = arith.constant 0 : i32
    %c0_i32_1 = arith.constant 0 : i32
    return %c0_i32, %c0_i32_0 : i32, i32
  }
  func.func @transform_2(%arg0: i32) -> (i32, i32) {
    %c0_i32 = arith.constant 0 : i32
    %c0_i32_0 = arith.constant 0 : i32
    %c0_i32_1 = arith.constant 0 : i32
    return %c0_i32, %c0_i32_0 : i32, i32
  }
  func.func @transform_3(%arg0: i32) -> (i32, i32) {
    %c0_i32 = arith.constant 0 : i32
    %c0_i32_0 = arith.constant 0 : i32
    %c0_i32_1 = arith.constant 0 : i32
    return %c0_i32, %c0_i32_0 : i32, i32
  }
  func.func @transform_4(%arg0: i32) -> (i32, i32) {
    %c0_i32 = arith.constant 0 : i32
    %c0_i32_0 = arith.constant 0 : i32
    %c0_i32_1 = arith.constant 0 : i32
    return %c0_i32, %c0_i32_0 : i32, i32
  }
  func.func @transform_5(%arg0: i32) -> (i32, i32) {
    %c0_i32 = arith.constant 0 : i32
    %c0_i32_0 = arith.constant 0 : i32
    %c0_i32_1 = arith.constant 0 : i32
    return %c0_i32, %c0_i32_0 : i32, i32
  }
  func.func @transform_6(%arg0: i32) -> (i32, i32) {
    %c0_i32 = arith.constant 0 : i32
    %c0_i32_0 = arith.constant 0 : i32
    %c0_i32_1 = arith.constant 0 : i32
    return %c0_i32, %c0_i32_0 : i32, i32
  }
  func.func @transform_7(%arg0: i32) -> (i32, i32) {
    %c0_i32 = arith.constant 0 : i32
    %c0_i32_0 = arith.constant 0 : i32
    %c0_i32_1 = arith.constant 0 : i32
    return %c0_i32, %c0_i32_0 : i32, i32
  }
  func.func @transform_8(%arg0: i32) -> (i32, i32) {
    %c0_i32 = arith.constant 0 : i32
    %c0_i32_0 = arith.constant 0 : i32
    %c0_i32_1 = arith.constant 0 : i32
    return %c0_i32, %c0_i32_0 : i32, i32
  }
  func.func @transform_9(%arg0: i32) -> (i32, i32) {
    %c0_i32 = arith.constant 0 : i32
    %c0_i32_0 = arith.constant 0 : i32
    return %c0_i32, %arg0 : i32, i32
  }
}

</mosaic_0001>

<llo_original>
// kernel: net3_forward.1
$region0: #{net3_forward.1}
  #allocation0 [shape = 'u32[]', space=smem, size = 0x4, offset = 0x4, fixed_abs, tag = 'smem constant byte address 0x4 - core index']
  #allocation1 [shape = 'u32[144,128]{1,0:T(1,128)}', space=vmem, size = 0x12000, scoped, tag = 'internal scratch']
  %s0 = inlined_call_operand.vmem [shape: f32[4,8], index: 0, kind: input, shape index: {}]
  %s1 = inlined_call_operand.vmem [shape: f32[64,4], index: 1, kind: input, shape index: {}]
  %s2 = inlined_call_operand.vmem [shape: f32[64,1], index: 2, kind: input, shape index: {}]
  %s3 = inlined_call_operand.vmem [shape: f32[64,64], index: 3, kind: input, shape index: {}]
  %s4 = inlined_call_operand.vmem [shape: f32[64,1], index: 4, kind: input, shape index: {}]
  %s5 = inlined_call_operand.vmem [shape: f32[64,64], index: 5, kind: input, shape index: {}]
  %s6 = inlined_call_operand.vmem [shape: f32[64,1], index: 6, kind: input, shape index: {}]
  %s7 = inlined_call_operand.vmem [shape: f32[9,64], index: 7, kind: input, shape index: {}]
  %s8 = inlined_call_operand.vmem [shape: f32[9,1], index: 8, kind: input, shape index: {}]
  %s9 = inlined_call_operand.vmem [shape: f32[9,8], index: 9, kind: output, shape index: {}]
  %s10 = sld [smem:[#allocation0]]
  $region80: #{net3_forward.1} parent=0
    _
  %s12 = ssub.s32 1, %s10
  %s13 = scalar_select 0, %s12, %s10
  $region1: #{net3_forward.1} parent=0
    #allocation2 [shape = 'u8[16384]{0}', space=vmem, size = 0x4000, scoped, tag = 'output window, operand 0, single buffered']
    // Predicated region
    $region2: #{net3_forward.1} parent=1 // pred_check
      _
    $region3: #{net3_forward.1} parent=1 // pred_check_branch
      %15 = sbr.rel (0) target = $region5
    $region4: #{net3_forward.1} parent=1 // pred_region
      _
    $region5: #{net3_forward.1} parent=1 // pred_fallthru
      _
    // Predicated region
    $region6: #{net3_forward.1} parent=1 // pred_check
      _
    $region7: #{net3_forward.1} parent=1 // pred_check_branch
      %17 = sbr.rel (0) target = $region9
    $region8: #{net3_forward.1} parent=1 // pred_region
      _
    $region9: #{net3_forward.1} parent=1 // pred_fallthru
      _
    // Predicated region
    $region10: #{net3_forward.1} parent=1 // pred_check
      _
    $region11: #{net3_forward.1} parent=1 // pred_check_branch
      %19 = sbr.rel (0) target = $region13
    $region12: #{net3_forward.1} parent=1 // pred_region
      _
    $region13: #{net3_forward.1} parent=1 // pred_fallthru
      _
    // Predicated region
    $region14: #{net3_forward.1} parent=1 // pred_check
      _
    $region15: #{net3_forward.1} parent=1 // pred_check_branch
      %21 = sbr.rel (0) target = $region17
    $region16: #{net3_forward.1} parent=1 // pred_region
      _
    $region17: #{net3_forward.1} parent=1 // pred_fallthru
      _
    // Predicated region
    $region18: #{net3_forward.1} parent=1 // pred_check
      _
    $region19: #{net3_forward.1} parent=1 // pred_check_branch
      %23 = sbr.rel (0) target = $region21
    $region20: #{net3_forward.1} parent=1 // pred_region
      _
    $region21: #{net3_forward.1} parent=1 // pred_fallthru
      _
    // Predicated region
    $region22: #{net3_forward.1} parent=1 // pred_check
      _
    $region23: #{net3_forward.1} parent=1 // pred_check_branch
      %25 = sbr.rel (0) target = $region25
    $region24: #{net3_forward.1} parent=1 // pred_region
      _
    $region25: #{net3_forward.1} parent=1 // pred_fallthru
      _
    // Predicated region
    $region26: #{net3_forward.1} parent=1 // pred_check
      _
    $region27: #{net3_forward.1} parent=1 // pred_check_branch
      %27 = sbr.rel (0) target = $region29
    $region28: #{net3_forward.1} parent=1 // pred_region
      _
    $region29: #{net3_forward.1} parent=1 // pred_fallthru
      _
    // Predicated region
    $region30: #{net3_forward.1} parent=1 // pred_check
      _
    $region31: #{net3_forward.1} parent=1 // pred_check_branch
      %29 = sbr.rel (0) target = $region33
    $region32: #{net3_forward.1} parent=1 // pred_region
      _
    $region33: #{net3_forward.1} parent=1 // pred_fallthru
      _
    // Predicated region
    $region34: #{net3_forward.1} parent=1 // pred_check
      _
    $region35: #{net3_forward.1} parent=1 // pred_check_branch
      %31 = sbr.rel (0) target = $region37
    $region36: #{net3_forward.1} parent=1 // pred_region
      _
    $region37: #{net3_forward.1} parent=1 // pred_fallthru
      _
    %v32 = vld [vmem:[%s1] sm:$0xff]
    %v33 = vld [vmem:[%s1 + $0x8] sm:$0xff]
    %v34 = vld [vmem:[%s1 + $0x10] sm:$0xff]
    %v35 = vld [vmem:[%s1 + $0x18] sm:$0xff]
    %v36 = vld [vmem:[%s1 + $0x20] sm:$0xff]
    %v37 = vld [vmem:[%s1 + $0x28] sm:$0xff]
    %v38 = vld [vmem:[%s1 + $0x30] sm:$0xff]
    %v39 = vld [vmem:[%s1 + $0x38] sm:$0xff]
    %v40 = vld [vmem:[%s2] sm:$0xff]
    %v41 = vld [vmem:[%s2 + $0x8] sm:$0xff]
    %v42 = vld [vmem:[%s2 + $0x10] sm:$0xff]
    %v43 = vld [vmem:[%s2 + $0x18] sm:$0xff]
    %v44 = vld [vmem:[%s2 + $0x20] sm:$0xff]
    %v45 = vld [vmem:[%s2 + $0x28] sm:$0xff]
    %v46 = vld [vmem:[%s2 + $0x30] sm:$0xff]
    %v47 = vld [vmem:[%s2 + $0x38] sm:$0xff]
    %v48 = vld [vmem:[%s3] sm:$0xff]
    %v49 = vld [vmem:[%s3 + $0x8] sm:$0xff]
    %v50 = vld [vmem:[%s3 + $0x10] sm:$0xff]
    %v51 = vld [vmem:[%s3 + $0x18] sm:$0xff]
    %v52 = vld [vmem:[%s3 + $0x20] sm:$0xff]
    %v53 = vld [vmem:[%s3 + $0x28] sm:$0xff]
    %v54 = vld [vmem:[%s3 + $0x30] sm:$0xff]
    %v55 = vld [vmem:[%s3 + $0x38] sm:$0xff]
    %v56 = vld [vmem:[%s4] sm:$0xff]
    %v57 = vld [vmem:[%s4 + $0x8] sm:$0xff]
    %v58 = vld [vmem:[%s4 + $0x10] sm:$0xff]
    %v59 = vld [vmem:[%s4 + $0x18] sm:$0xff]
    %v60 = vld [vmem:[%s4 + $0x20] sm:$0xff]
    %v61 = vld [vmem:[%s4 + $0x28] sm:$0xff]
    %v62 = vld [vmem:[%s4 + $0x30] sm:$0xff]
    %v63 = vld [vmem:[%s4 + $0x38] sm:$0xff]
    %v64 = vld [vmem:[%s5] sm:$0xff]
    %v65 = vld [vmem:[%s5 + $0x8] sm:$0xff]
    %v66 = vld [vmem:[%s5 + $0x10] sm:$0xff]
    %v67 = vld [vmem:[%s5 + $0x18] sm:$0xff]
    %v68 = vld [vmem:[%s5 + $0x20] sm:$0xff]
    %v69 = vld [vmem:[%s5 + $0x28] sm:$0xff]
    %v70 = vld [vmem:[%s5 + $0x30] sm:$0xff]
    %v71 = vld [vmem:[%s5 + $0x38] sm:$0xff]
    %v72 = vld [vmem:[%s6] sm:$0xff]
    %v73 = vld [vmem:[%s6 + $0x8] sm:$0xff]
    %v74 = vld [vmem:[%s6 + $0x10] sm:$0xff]
    %v75 = vld [vmem:[%s6 + $0x18] sm:$0xff]
    %v76 = vld [vmem:[%s6 + $0x20] sm:$0xff]
    %v77 = vld [vmem:[%s6 + $0x28] sm:$0xff]
    %v78 = vld [vmem:[%s6 + $0x30] sm:$0xff]
    %v79 = vld [vmem:[%s6 + $0x38] sm:$0xff]
    %v80 = vld [vmem:[%s7] sm:$0xff]
    %v81 = vld [vmem:[%s7 + $0x8] sm:$0x1]
    %v82 = vld [vmem:[%s8] sm:$0xff]
    %v83 = vld [vmem:[%s8 + $0x8] sm:$0x1]
    %v84 = vld [vmem:[%s0] sm:$0xff]
    %86 = vset.pattern.permute.xlu0 0
    %87 = vperm.xlu0 %86, %v40
    %v88 = vpop.permute.xlu0 %87
    %91 = vset.pattern.permute.xlu0 0
    %92 = vperm.xlu0 %91, %v41
    %v93 = vpop.permute.xlu0 %92
    %96 = vset.pattern.permute.xlu0 0
    %97 = vperm.xlu0 %96, %v42
    %v98 = vpop.permute.xlu0 %97
    %101 = vset.pattern.permute.xlu0 0
    %102 = vperm.xlu0 %101, %v43
    %v103 = vpop.permute.xlu0 %102
    %106 = vset.pattern.permute.xlu0 0
    %107 = vperm.xlu0 %106, %v44
    %v108 = vpop.permute.xlu0 %107
    %111 = vset.pattern.permute.xlu0 0
    %112 = vperm.xlu0 %111, %v45
    %v113 = vpop.permute.xlu0 %112
    %116 = vset.pattern.permute.xlu0 0
    %117 = vperm.xlu0 %116, %v46
    %v118 = vpop.permute.xlu0 %117
    %121 = vset.pattern.permute.xlu0 0
    %122 = vperm.xlu0 %121, %v47
    %v123 = vpop.permute.xlu0 %122
    %v126 = vcombine.high %v84, %v84
    %vm127 = vcmask 31744
    %v129 = vsel %vm127, %v32, 0
    %v132 = vsel %vm127, %v33, 0
    %v135 = vsel %vm127, %v34, 0
    %v138 = vsel %vm127, %v35, 0
    %v141 = vsel %vm127, %v36, 0
    %v144 = vsel %vm127, %v37, 0
    %v147 = vsel %vm127, %v38, 0
    %v150 = vsel %vm127, %v39, 0
    %vm152 = vcmask 1043456
    %v153 = vsel %vm152, %v84, 0
    %v155 = vsel %vm152, %v126, 0
    %157 = vmatprep.subr.mxu0 %v155
    %158 = vmatpush1.msra.mxu0 %v153
    %159 = vmatprep.subr.mxu0 0.0
    %160 = vmatpush1.msra.mxu0 0.0
    %161 = vmatprep.subr.mxu0 0.0
    %162 = vmatpush1.msra.mxu0 0.0
    %163 = vmatprep.subr.mxu0 0.0
    %164 = vmatpush1.msra.mxu0 0.0
    %165 = vmatprep.subr.mxu0 0.0
    %166 = vmatpush1.msra.mxu0 0.0
    %167 = vmatprep.subr.mxu0 0.0
    %168 = vmatpush1.msra.mxu0 0.0
    %169 = vmatprep.subr.mxu0 0.0
    %170 = vmatpush1.msra.mxu0 0.0
    %171 = vmatprep.subr.mxu0 0.0
    %172 = vmatpush1.msra.mxu0 0.0
    %173 = vmatprep.subr.mxu0 0.0
    %174 = vmatpush1.msra.mxu0 0.0
    %175 = vmatprep.subr.mxu0 0.0
    %176 = vmatpush1.msra.mxu0 0.0
    %177 = vmatprep.subr.mxu0 0.0
    %178 = vmatpush1.msra.mxu0 0.0
    %179 = vmatprep.subr.mxu0 0.0
    %180 = vmatpush1.msra.mxu0 0.0
    %181 = vmatprep.subr.mxu0 0.0
    %182 = vmatpush1.msra.mxu0 0.0
    %183 = vmatprep.subr.mxu0 0.0
    %184 = vmatpush1.msra.mxu0 0.0
    %185 = vmatprep.subr.mxu0 0.0
    %186 = vmatpush1.msra.mxu0 0.0
    %187 = vmatprep.subr.mxu0 0.0
    %188 = vmatpush1.msra.mxu0 0.0
    %189 = vmatprep.subr.mxu0 0.0
    %190 = vmatpush1.msra.mxu0 0.0
    %191 = vmatprep.subr.mxu0 0.0
    %192 = vmatpush1.msra.mxu0 0.0
    %193 = vmatprep.subr.mxu0 0.0
    %194 = vmatpush1.msra.mxu0 0.0
    %195 = vmatprep.subr.mxu0 0.0
    %196 = vmatpush1.msra.mxu0 0.0
    %197 = vmatprep.subr.mxu0 0.0
    %198 = vmatpush1.msra.mxu0 0.0
    %199 = vmatprep.subr.mxu0 0.0
    %200 = vmatpush1.msra.mxu0 0.0
    %201 = vmatprep.subr.mxu0 0.0
    %202 = vmatpush1.msra.mxu0 0.0
    %203 = vmatprep.subr.mxu0 0.0
    %204 = vmatpush1.msra.mxu0 0.0
    %205 = vmatprep.subr.mxu0 0.0
    %206 = vmatpush1.msra.mxu0 0.0
    %207 = vmatprep.subr.mxu0 0.0
    %208 = vmatpush1.msra.mxu0 0.0
    %209 = vmatprep.subr.mxu0 0.0
    %210 = vmatpush1.msra.mxu0 0.0
    %211 = vmatprep.subr.mxu0 0.0
    %212 = vmatpush1.msra.mxu0 0.0
    %213 = vmatprep.subr.mxu0 0.0
    %214 = vmatpush1.msra.mxu0 0.0
    %215 = vmatprep.subr.mxu0 0.0
    %216 = vmatpush1.msra.mxu0 0.0
    %217 = vmatprep.subr.mxu0 0.0
    %218 = vmatpush1.msra.mxu0 0.0
    %219 = vmatprep.subr.mxu0 0.0
    %220 = vmatpush1.msra.mxu0 0.0
    %221 = vmatprep.mubr.f32.mxu0 0.0
    %222 = vmatmul.mubr.f32.gmra.mrb[0].mxu0 %v129
    %v223 = vpop.f32.mrb[0].mxu0
    %v224 = vadd.f32 %v88, %v223
    %v225 = vpop.f32.mrb[0].mxu0
    %v226 = vadd.f32 %v88, %v225
    %227 = vmatprep.mubr.f32.mxu0 0.0
    %228 = vmatmul.mubr.f32.gmra.mrb[0].mxu0 %v132
    %v229 = vpop.f32.mrb[0].mxu0
    %v230 = vadd.f32 %v93, %v229
    %v231 = vpop.f32.mrb[0].mxu0
    %v232 = vadd.f32 %v93, %v231
    %233 = vmatprep.mubr.f32.mxu0 0.0
    %234 = vmatmul.mubr.f32.gmra.mrb[0].mxu0 %v135
    %v235 = vpop.f32.mrb[0].mxu0
    %v236 = vadd.f32 %v98, %v235
    %v237 = vpop.f32.mrb[0].mxu0
    %v238 = vadd.f32 %v98, %v237
    %239 = vmatprep.mubr.f32.mxu0 0.0
    %240 = vmatmul.mubr.f32.gmra.mrb[0].mxu0 %v138
    %v241 = vpop.f32.mrb[0].mxu0
    %v242 = vadd.f32 %v103, %v241
    %v243 = vpop.f32.mrb[0].mxu0
    %v244 = vadd.f32 %v103, %v243
    %245 = vmatprep.mubr.f32.mxu0 0.0
    %246 = vmatmul.mubr.f32.gmra.mrb[0].mxu0 %v141
    %v247 = vpop.f32.mrb[0].mxu0
    %v248 = vadd.f32 %v108, %v247
    %v249 = vpop.f32.mrb[0].mxu0
    %v250 = vadd.f32 %v108, %v249
    %251 = vmatprep.mubr.f32.mxu0 0.0
    %252 = vmatmul.mubr.f32.gmra.mrb[0].mxu0 %v144
    %v253 = vpop.f32.mrb[0].mxu0
    %v254 = vadd.f32 %v113, %v253
    %v255 = vpop.f32.mrb[0].mxu0
    %v256 = vadd.f32 %v113, %v255
    %257 = vmatprep.mubr.f32.mxu0 0.0
    %258 = vmatmul.mubr.f32.gmra.mrb[0].mxu0 %v147
    %v259 = vpop.f32.mrb[0].mxu0
    %v260 = vadd.f32 %v118, %v259
    %v261 = vpop.f32.mrb[0].mxu0
    %v262 = vadd.f32 %v118, %v261
    %263 = vmatprep.mubr.f32.mxu0 0.0
    %264 = vmatmul.mubr.f32.gmra.mrb[0].mxu0 %v150
    %v265 = vpop.f32.mrb[0].mxu0
    %v266 = vadd.f32 %v123, %v265
    %v267 = vpop.f32.mrb[0].mxu0
    %v268 = vadd.f32 %v123, %v267
    %269 = vdwg.mxu0
    %v270 = vmax.f32 %v224, 0.0
    %v271 = vmax.f32 %v226, 0.0
    %v272 = vmax.f32 %v230, 0.0
    %v273 = vmax.f32 %v232, 0.0
    %v274 = vmax.f32 %v236, 0.0
    %v275 = vmax.f32 %v238, 0.0
    %v276 = vmax.f32 %v242, 0.0
    %v277 = vmax.f32 %v244, 0.0
    %v278 = vmax.f32 %v248, 0.0
    %v279 = vmax.f32 %v250, 0.0
    %v280 = vmax.f32 %v254, 0.0
    %v281 = vmax.f32 %v256, 0.0
    %v282 = vmax.f32 %v260, 0.0
    %v283 = vmax.f32 %v262, 0.0
    %v284 = vmax.f32 %v266, 0.0
    %v285 = vmax.f32 %v268, 0.0
    %287 = vset.pattern.permute.xlu0 0
    %288 = vperm.xlu0 %287, %v56
    %v289 = vpop.permute.xlu0 %288
    %292 = vset.pattern.permute.xlu0 0
    %293 = vperm.xlu0 %292, %v57
    %v294 = vpop.permute.xlu0 %293
    %297 = vset.pattern.permute.xlu0 0
    %298 = vperm.xlu0 %297, %v58
    %v299 = vpop.permute.xlu0 %298
    %302 = vset.pattern.permute.xlu0 0
    %303 = vperm.xlu0 %302, %v59
    %v304 = vpop.permute.xlu0 %303
    %307 = vset.pattern.permute.xlu0 0
    %308 = vperm.xlu0 %307, %v60
    %v309 = vpop.permute.xlu0 %308
    %312 = vset.pattern.permute.xlu0 0
    %313 = vperm.xlu0 %312, %v61
    %v314 = vpop.permute.xlu0 %313
    %317 = vset.pattern.permute.xlu0 0
    %318 = vperm.xlu0 %317, %v62
    %v319 = vpop.permute.xlu0 %318
    %322 = vset.pattern.permute.xlu0 0
    %323 = vperm.xlu0 %322, %v63
    %v324 = vpop.permute.xlu0 %323
    %vm326 = vcmask 523264
    %v328 = vsel %vm326, %v48, 0
    %v331 = vsel %vm326, %v49, 0
    %v334 = vsel %vm326, %v50, 0
    %v337 = vsel %vm326, %v51, 0
    %v340 = vsel %vm326, %v52, 0
    %v343 = vsel %vm326, %v53, 0
    %v346 = vsel %vm326, %v54, 0
    %v349 = vsel %vm326, %v55, 0
    %351 = vmatprep.subr.mxu0 %v271
    %352 = vmatpush1.msra.mxu0 %v270
    %353 = vmatprep.subr.mxu0 %v273
    %354 = vmatpush1.msra.mxu0 %v272
    %355 = vmatprep.subr.mxu0 %v275
    %356 = vmatpush1.msra.mxu0 %v274
    %357 = vmatprep.subr.mxu0 %v277
    %358 = vmatpush1.msra.mxu0 %v276
    %359 = vmatprep.subr.mxu0 %v279
    %360 = vmatpush1.msra.mxu0 %v278
    %361 = vmatprep.subr.mxu0 %v281
    %362 = vmatpush1.msra.mxu0 %v280
    %363 = vmatprep.subr.mxu0 %v283
    %364 = vmatpush1.msra.mxu0 %v282
    %365 = vmatprep.subr.mxu0 %v285
    %366 = vmatpush1.msra.mxu0 %v284
    %367 = vmatprep.subr.mxu0 0.0
    %368 = vmatpush1.msra.mxu0 0.0
    %369 = vmatprep.subr.mxu0 0.0
    %370 = vmatpush1.msra.mxu0 0.0
    %371 = vmatprep.subr.mxu0 0.0
    %372 = vmatpush1.msra.mxu0 0.0
    %373 = vmatprep.subr.mxu0 0.0
    %374 = vmatpush1.msra.mxu0 0.0
    %375 = vmatprep.subr.mxu0 0.0
    %376 = vmatpush1.msra.mxu0 0.0
    %377 = vmatprep.subr.mxu0 0.0
    %378 = vmatpush1.msra.mxu0 0.0
    %379 = vmatprep.subr.mxu0 0.0
    %380 = vmatpush1.msra.mxu0 0.0
    %381 = vmatprep.subr.mxu0 0.0
    %382 = vmatpush1.msra.mxu0 0.0
    %383 = vmatprep.subr.mxu0 0.0
    %384 = vmatpush1.msra.mxu0 0.0
    %385 = vmatprep.subr.mxu0 0.0
    %386 = vmatpush1.msra.mxu0 0.0
    %387 = vmatprep.subr.mxu0 0.0
    %388 = vmatpush1.msra.mxu0 0.0
    %389 = vmatprep.subr.mxu0 0.0
    %390 = vmatpush1.msra.mxu0 0.0
    %391 = vmatprep.subr.mxu0 0.0
    %392 = vmatpush1.msra.mxu0 0.0
    %393 = vmatprep.subr.mxu0 0.0
    %394 = vmatpush1.msra.mxu0 0.0
    %395 = vmatprep.subr.mxu0 0.0
    %396 = vmatpush1.msra.mxu0 0.0
    %397 = vmatprep.subr.mxu0 0.0
    %398 = vmatpush1.msra.mxu0 0.0
    %399 = vmatprep.subr.mxu0 0.0
    %400 = vmatpush1.msra.mxu0 0.0
    %401 = vmatprep.subr.mxu0 0.0
    %402 = vmatpush1.msra.mxu0 0.0
    %403 = vmatprep.subr.mxu0 0.0
    %404 = vmatpush1.msra.mxu0 0.0
    %405 = vmatprep.subr.mxu0 0.0
    %406 = vmatpush1.msra.mxu0 0.0
    %407 = vmatprep.subr.mxu0 0.0
    %408 = vmatpush1.msra.mxu0 0.0
    %409 = vmatprep.subr.mxu0 0.0
    %410 = vmatpush1.msra.mxu0 0.0
    %411 = vmatprep.subr.mxu0 0.0
    %412 = vmatpush1.msra.mxu0 0.0
    %413 = vmatprep.subr.mxu0 0.0
    %414 = vmatpush1.msra.mxu0 0.0
    %415 = vmatprep.mubr.f32.mxu0 0.0
    %416 = vmatmul.mubr.f32.gmra.mrb[0].mxu0 %v328
    %v417 = vpop.f32.mrb[0].mxu0
    %v418 = vadd.f32 %v289, %v417
    %v419 = vpop.f32.mrb[0].mxu0
    %v420 = vadd.f32 %v289, %v419
    %421 = vmatprep.mubr.f32.mxu0 0.0
    %422 = vmatmul.mubr.f32.gmra.mrb[0].mxu0 %v331
    %v423 = vpop.f32.mrb[0].mxu0
    %v424 = vadd.f32 %v294, %v423
    %v425 = vpop.f32.mrb[0].mxu0
    %v426 = vadd.f32 %v294, %v425
    %427 = vmatprep.mubr.f32.mxu0 0.0
    %428 = vmatmul.mubr.f32.gmra.mrb[0].mxu0 %v334
    %v429 = vpop.f32.mrb[0].mxu0
    %v430 = vadd.f32 %v299, %v429
    %v431 = vpop.f32.mrb[0].mxu0
    %v432 = vadd.f32 %v299, %v431
    %433 = vmatprep.mubr.f32.mxu0 0.0
    %434 = vmatmul.mubr.f32.gmra.mrb[0].mxu0 %v337
    %v435 = vpop.f32.mrb[0].mxu0
    %v436 = vadd.f32 %v304, %v435
    %v437 = vpop.f32.mrb[0].mxu0
    %v438 = vadd.f32 %v304, %v437
    %439 = vmatprep.mubr.f32.mxu0 0.0
    %440 = vmatmul.mubr.f32.gmra.mrb[0].mxu0 %v340
    %v441 = vpop.f32.mrb[0].mxu0
    %v442 = vadd.f32 %v309, %v441
    %v443 = vpop.f32.mrb[0].mxu0
    %v444 = vadd.f32 %v309, %v443
    %445 = vmatprep.mubr.f32.mxu0 0.0
    %446 = vmatmul.mubr.f32.gmra.mrb[0].mxu0 %v343
    %v447 = vpop.f32.mrb[0].mxu0
    %v448 = vadd.f32 %v314, %v447
    %v449 = vpop.f32.mrb[0].mxu0
    %v450 = vadd.f32 %v314, %v449
    %451 = vmatprep.mubr.f32.mxu0 0.0
    %452 = vmatmul.mubr.f32.gmra.mrb[0].mxu0 %v346
    %v453 = vpop.f32.mrb[0].mxu0
    %v454 = vadd.f32 %v319, %v453
    %v455 = vpop.f32.mrb[0].mxu0
    %v456 = vadd.f32 %v319, %v455
    %457 = vmatprep.mubr.f32.mxu0 0.0
    %458 = vmatmul.mubr.f32.gmra.mrb[0].mxu0 %v349
    %v459 = vpop.f32.mrb[0].mxu0
    %v460 = vadd.f32 %v324, %v459
    %v461 = vpop.f32.mrb[0].mxu0
    %v462 = vadd.f32 %v324, %v461
    %463 = vdwg.mxu0
    %v464 = vmax.f32 %v418, 0.0
    %v465 = vmax.f32 %v420, 0.0
    %v466 = vmax.f32 %v424, 0.0
    %v467 = vmax.f32 %v426, 0.0
    %v468 = vmax.f32 %v430, 0.0
    %v469 = vmax.f32 %v432, 0.0
    %v470 = vmax.f32 %v436, 0.0
    %v471 = vmax.f32 %v438, 0.0
    %v472 = vmax.f32 %v442, 0.0
    %v473 = vmax.f32 %v444, 0.0
    %v474 = vmax.f32 %v448, 0.0
    %v475 = vmax.f32 %v450, 0.0
    %v476 = vmax.f32 %v454, 0.0
    %v477 = vmax.f32 %v456, 0.0
    %v478 = vmax.f32 %v460, 0.0
    %v479 = vmax.f32 %v462, 0.0
    %481 = vset.pattern.permute.xlu0 0
    %482 = vperm.xlu0 %481, %v72
    %v483 = vpop.permute.xlu0 %482
    %486 = vset.pattern.permute.xlu0 0
    %487 = vperm.xlu0 %486, %v73
    %v488 = vpop.permute.xlu0 %487
    %491 = vset.pattern.permute.xlu0 0
    %492 = vperm.xlu0 %491, %v74
    %v493 = vpop.permute.xlu0 %492
    %496 = vset.pattern.permute.xlu0 0
    %497 = vperm.xlu0 %496, %v75
    %v498 = vpop.permute.xlu0 %497
    %501 = vset.pattern.permute.xlu0 0
    %502 = vperm.xlu0 %501, %v76
    %v503 = vpop.permute.xlu0 %502
    %506 = vset.pattern.permute.xlu0 0
    %507 = vperm.xlu0 %506, %v77
    %v508 = vpop.permute.xlu0 %507
    %511 = vset.pattern.permute.xlu0 0
    %512 = vperm.xlu0 %511, %v78
    %v513 = vpop.permute.xlu0 %512
    %516 = vset.pattern.permute.xlu0 0
    %517 = vperm.xlu0 %516, %v79
    %v518 = vpop.permute.xlu0 %517
    %v521 = vsel %vm326, %v64, 0
    %v524 = vsel %vm326, %v65, 0
    %v527 = vsel %vm326, %v66, 0
    %v530 = vsel %vm326, %v67, 0
    %v533 = vsel %vm326, %v68, 0
    %v536 = vsel %vm326, %v69, 0
    %v539 = vsel %vm326, %v70, 0
    %v542 = vsel %vm326, %v71, 0
    %544 = vmatprep.subr.mxu0 %v465
    %545 = vmatpush1.msra.mxu0 %v464
    %546 = vmatprep.subr.mxu0 %v467
    %547 = vmatpush1.msra.mxu0 %v466
    %548 = vmatprep.subr.mxu0 %v469
    %549 = vmatpush1.msra.mxu0 %v468
    %550 = vmatprep.subr.mxu0 %v471
    %551 = vmatpush1.msra.mxu0 %v470
    %552 = vmatprep.subr.mxu0 %v473
    %553 = vmatpush1.msra.mxu0 %v472
    %554 = vmatprep.subr.mxu0 %v475
    %555 = vmatpush1.msra.mxu0 %v474
    %556 = vmatprep.subr.mxu0 %v477
    %557 = vmatpush1.msra.mxu0 %v476
    %558 = vmatprep.subr.mxu0 %v479
    %559 = vmatpush1.msra.mxu0 %v478
    %560 = vmatprep.subr.mxu0 0.0
    %561 = vmatpush1.msra.mxu0 0.0
    %562 = vmatprep.subr.mxu0 0.0
    %563 = vmatpush1.msra.mxu0 0.0
    %564 = vmatprep.subr.mxu0 0.0
    %565 = vmatpush1.msra.mxu0 0.0
    %566 = vmatprep.subr.mxu0 0.0
    %567 = vmatpush1.msra.mxu0 0.0
    %568 = vmatprep.subr.mxu0 0.0
    %569 = vmatpush1.msra.mxu0 0.0
    %570 = vmatprep.subr.mxu0 0.0
    %571 = vmatpush1.msra.mxu0 0.0
    %572 = vmatprep.subr.mxu0 0.0
    %573 = vmatpush1.msra.mxu0 0.0
    %574 = vmatprep.subr.mxu0 0.0
    %575 = vmatpush1.msra.mxu0 0.0
    %576 = vmatprep.subr.mxu0 0.0
    %577 = vmatpush1.msra.mxu0 0.0
    %578 = vmatprep.subr.mxu0 0.0
    %579 = vmatpush1.msra.mxu0 0.0
    %580 = vmatprep.subr.mxu0 0.0
    %581 = vmatpush1.msra.mxu0 0.0
    %582 = vmatprep.subr.mxu0 0.0
    %583 = vmatpush1.msra.mxu0 0.0
    %584 = vmatprep.subr.mxu0 0.0
    %585 = vmatpush1.msra.mxu0 0.0
    %586 = vmatprep.subr.mxu0 0.0
    %587 = vmatpush1.msra.mxu0 0.0
    %588 = vmatprep.subr.mxu0 0.0
    %589 = vmatpush1.msra.mxu0 0.0
    %590 = vmatprep.subr.mxu0 0.0
    %591 = vmatpush1.msra.mxu0 0.0
    %592 = vmatprep.subr.mxu0 0.0
    %593 = vmatpush1.msra.mxu0 0.0
    %594 = vmatprep.subr.mxu0 0.0
    %595 = vmatpush1.msra.mxu0 0.0
    %596 = vmatprep.subr.mxu0 0.0
    %597 = vmatpush1.msra.mxu0 0.0
    %598 = vmatprep.subr.mxu0 0.0
    %599 = vmatpush1.msra.mxu0 0.0
    %600 = vmatprep.subr.mxu0 0.0
    %601 = vmatpush1.msra.mxu0 0.0
    %602 = vmatprep.subr.mxu0 0.0
    %603 = vmatpush1.msra.mxu0 0.0
    %604 = vmatprep.subr.mxu0 0.0
    %605 = vmatpush1.msra.mxu0 0.0
    %606 = vmatprep.subr.mxu0 0.0
    %607 = vmatpush1.msra.mxu0 0.0
    %608 = vmatprep.mubr.f32.mxu0 0.0
    %609 = vmatmul.mubr.f32.gmra.mrb[0].mxu0 %v521
    %v610 = vpop.f32.mrb[0].mxu0
    %v611 = vadd.f32 %v483, %v610
    %v612 = vpop.f32.mrb[0].mxu0
    %v613 = vadd.f32 %v483, %v612
    %614 = vmatprep.mubr.f32.mxu0 0.0
    %615 = vmatmul.mubr.f32.gmra.mrb[0].mxu0 %v524
    %v616 = vpop.f32.mrb[0].mxu0
    %v617 = vadd.f32 %v488, %v616
    %v618 = vpop.f32.mrb[0].mxu0
    %v619 = vadd.f32 %v488, %v618
    %620 = vmatprep.mubr.f32.mxu0 0.0
    %621 = vmatmul.mubr.f32.gmra.mrb[0].mxu0 %v527
    %v622 = vpop.f32.mrb[0].mxu0
    %v623 = vadd.f32 %v493, %v622
    %v624 = vpop.f32.mrb[0].mxu0
    %v625 = vadd.f32 %v493, %v624
    %626 = vmatprep.mubr.f32.mxu0 0.0
    %627 = vmatmul.mubr.f32.gmra.mrb[0].mxu0 %v530
    %v628 = vpop.f32.mrb[0].mxu0
    %v629 = vadd.f32 %v498, %v628
    %v630 = vpop.f32.mrb[0].mxu0
    %v631 = vadd.f32 %v498, %v630
    %632 = vmatprep.mubr.f32.mxu0 0.0
    %633 = vmatmul.mubr.f32.gmra.mrb[0].mxu0 %v533
    %v634 = vpop.f32.mrb[0].mxu0
    %v635 = vadd.f32 %v503, %v634
    %v636 = vpop.f32.mrb[0].mxu0
    %v637 = vadd.f32 %v503, %v636
    %638 = vmatprep.mubr.f32.mxu0 0.0
    %639 = vmatmul.mubr.f32.gmra.mrb[0].mxu0 %v536
    %v640 = vpop.f32.mrb[0].mxu0
    %v641 = vadd.f32 %v508, %v640
    %v642 = vpop.f32.mrb[0].mxu0
    %v643 = vadd.f32 %v508, %v642
    %644 = vmatprep.mubr.f32.mxu0 0.0
    %645 = vmatmul.mubr.f32.gmra.mrb[0].mxu0 %v539
    %v646 = vpop.f32.mrb[0].mxu0
    %v647 = vadd.f32 %v513, %v646
    %v648 = vpop.f32.mrb[0].mxu0
    %v649 = vadd.f32 %v513, %v648
    %650 = vmatprep.mubr.f32.mxu0 0.0
    %651 = vmatmul.mubr.f32.gmra.mrb[0].mxu0 %v542
    %v652 = vpop.f32.mrb[0].mxu0
    %v653 = vadd.f32 %v518, %v652
    %v654 = vpop.f32.mrb[0].mxu0
    %v655 = vadd.f32 %v518, %v654
    %656 = vdwg.mxu0
    %v657 = vmax.f32 %v611, 0.0
    %v658 = vmax.f32 %v613, 0.0
    %v659 = vmax.f32 %v617, 0.0
    %v660 = vmax.f32 %v619, 0.0
    %v661 = vmax.f32 %v623, 0.0
    %v662 = vmax.f32 %v625, 0.0
    %v663 = vmax.f32 %v629, 0.0
    %v664 = vmax.f32 %v631, 0.0
    %v665 = vmax.f32 %v635, 0.0
    %v666 = vmax.f32 %v637, 0.0
    %v667 = vmax.f32 %v641, 0.0
    %v668 = vmax.f32 %v643, 0.0
    %v669 = vmax.f32 %v647, 0.0
    %v670 = vmax.f32 %v649, 0.0
    %v671 = vmax.f32 %v653, 0.0
    %v672 = vmax.f32 %v655, 0.0
    %674 = vset.pattern.permute.xlu0 0
    %675 = vperm.xlu0 %674, %v82
    %v676 = vpop.permute.xlu0 %675
    %679 = vset.pattern.permute.xlu0 0
    %680 = vperm.xlu0 %679, %v83
    %v681 = vpop.permute.xlu0 %680
    %v684 = vsel %vm326, %v80, 0
    %v687 = vsel %vm326, %v81, 0
    %689 = vmatprep.subr.mxu0 %v658
    %690 = vmatpush1.msra.mxu0 %v657
    %691 = vmatprep.subr.mxu0 %v660
    %692 = vmatpush1.msra.mxu0 %v659
    %693 = vmatprep.subr.mxu0 %v662
    %694 = vmatpush1.msra.mxu0 %v661
    %695 = vmatprep.subr.mxu0 %v664
    %696 = vmatpush1.msra.mxu0 %v663
    %697 = vmatprep.subr.mxu0 %v666
    %698 = vmatpush1.msra.mxu0 %v665
    %699 = vmatprep.subr.mxu0 %v668
    %700 = vmatpush1.msra.mxu0 %v667
    %701 = vmatprep.subr.mxu0 %v670
    %702 = vmatpush1.msra.mxu0 %v669
    %703 = vmatprep.subr.mxu0 %v672
    %704 = vmatpush1.msra.mxu0 %v671
    %705 = vmatprep.subr.mxu0 0.0
    %706 = vmatpush1.msra.mxu0 0.0
    %707 = vmatprep.subr.mxu0 0.0
    %708 = vmatpush1.msra.mxu0 0.0
    %709 = vmatprep.subr.mxu0 0.0
    %710 = vmatpush1.msra.mxu0 0.0
    %711 = vmatprep.subr.mxu0 0.0
    %712 = vmatpush1.msra.mxu0 0.0
    %713 = vmatprep.subr.mxu0 0.0
    %714 = vmatpush1.msra.mxu0 0.0
    %715 = vmatprep.subr.mxu0 0.0
    %716 = vmatpush1.msra.mxu0 0.0
    %717 = vmatprep.subr.mxu0 0.0
    %718 = vmatpush1.msra.mxu0 0.0
    %719 = vmatprep.subr.mxu0 0.0
    %720 = vmatpush1.msra.mxu0 0.0
    %721 = vmatprep.subr.mxu0 0.0
    %722 = vmatpush1.msra.mxu0 0.0
    %723 = vmatprep.subr.mxu0 0.0
    %724 = vmatpush1.msra.mxu0 0.0
    %725 = vmatprep.subr.mxu0 0.0
    %726 = vmatpush1.msra.mxu0 0.0
    %727 = vmatprep.subr.mxu0 0.0
    %728 = vmatpush1.msra.mxu0 0.0
    %729 = vmatprep.subr.mxu0 0.0
    %730 = vmatpush1.msra.mxu0 0.0
    %731 = vmatprep.subr.mxu0 0.0
    %732 = vmatpush1.msra.mxu0 0.0
    %733 = vmatprep.subr.mxu0 0.0
    %734 = vmatpush1.msra.mxu0 0.0
    %735 = vmatprep.subr.mxu0 0.0
    %736 = vmatpush1.msra.mxu0 0.0
    %737 = vmatprep.subr.mxu0 0.0
    %738 = vmatpush1.msra.mxu0 0.0
    %739 = vmatprep.subr.mxu0 0.0
    %740 = vmatpush1.msra.mxu0 0.0
    %741 = vmatprep.subr.mxu0 0.0
    %742 = vmatpush1.msra.mxu0 0.0
    %743 = vmatprep.subr.mxu0 0.0
    %744 = vmatpush1.msra.mxu0 0.0
    %745 = vmatprep.subr.mxu0 0.0
    %746 = vmatpush1.msra.mxu0 0.0
    %747 = vmatprep.subr.mxu0 0.0
    %748 = vmatpush1.msra.mxu0 0.0
    %749 = vmatprep.subr.mxu0 0.0
    %750 = vmatpush1.msra.mxu0 0.0
    %751 = vmatprep.subr.mxu0 0.0
    %752 = vmatpush1.msra.mxu0 0.0
    %753 = vmatprep.mubr.f32.mxu0 0.0
    %754 = vmatmul.mubr.f32.gmra.mrb[0].mxu0 %v684
    %v755 = vpop.f32.mrb[0].mxu0
    %v756 = vadd.f32 %v676, %v755
    %v757 = vpop.f32.mrb[0].mxu0
    %v758 = vadd.f32 %v676, %v757
    %759 = vmatprep.mubr.f32.mxu0 0.0
    %760 = vmatmul.mubr.f32.gmra.mrb[0].mxu0 %v687
    %v761 = vpop.f32.mrb[0].mxu0
    %v762 = vadd.f32 %v681, %v761
    %v763 = vpop.f32.mrb[0].mxu0
    %v764 = vadd.f32 %v681, %v763
    %765 = vdwg.mxu0
    %766 = vst [vmem:[#allocation2] sm:$0xff] %v756
    %767 = vst [vmem:[#allocation2 + $0x8] sm:$0xff] %v758
    %768 = vst [vmem:[#allocation2 + $0x10] sm:$0x1] %v762
    %769 = vst [vmem:[#allocation2 + $0x18] sm:$0x1] %v764
    // Predicated region
    $region38: #{net3_forward.1} parent=1 // pred_check
      _
    $region39: #{net3_forward.1} parent=1 // pred_check_branch
      %771 = sbr.rel (0) target = $region41
    $region40: #{net3_forward.1} parent=1 // pred_region
      // Predicated region
      $region42: #{net3_forward.1} parent=40 // pred_check
        _
      $region43: #{net3_forward.1} parent=40 // pred_check_branch
        %773 = sbr.rel (0) target = $region45
      $region44: #{net3_forward.1} parent=40 // pred_region
        // Predicated region
        $region46: #{net3_forward.1} parent=44 // pred_check
          _
        $region47: #{net3_forward.1} parent=44 // pred_check_branch
          %775 = sbr.rel (0) target = $region49
        $region48: #{net3_forward.1} parent=44 // pred_region
          // Predicated region
          $region61: #{net3_forward.1} parent=48 // pred_check
            _
          $region62: #{net3_forward.1} parent=48 // pred_check_branch
            %792 = sbr.rel (0) target = $region64
          $region63: #{net3_forward.1} parent=48 // pred_region
            loop: start=0, step=1, limit=1
            $region65: #{net3_forward.1} parent=63 // loop_pre_header
              _
            $region66: #{net3_forward.1} parent=63 // loop_header
              %s794 = sphi 0, %s798
              %p795 = scmp.ge.s32.totalorder %s794, 1
              %s799 = sphi [#allocation2], [#allocation2]
              %s800 = sphi %s9, %s9
            $region67: #{net3_forward.1} parent=63 // loop_header_branch
              %797 = sbr.rel (%p795) target = $region71
            $region68: #{net3_forward.1} parent=63 // loop_body
              %v801 = vld [vmem:[%s799] sm:$0xff]
              %802 = vst [vmem:[%s800] sm:$0xff] %v801
              %v803 = vld [vmem:[%s799 + $0x10] sm:$0xff]
              %804 = vst [vmem:[%s800 + $0x8] sm:$0xff] %v803
            $region69: #{net3_forward.1} parent=63 // loop_footer
              %s798 = sadd.s32 1, %s794
            $region70: #{net3_forward.1} parent=63 // loop_footer_branch
              %793 = sbr.rel target = $region66
            $region71: #{net3_forward.1} parent=63 // loop_exit
              _
          $region64: #{net3_forward.1} parent=48 // pred_fallthru
            _
          // Predicated region
          $region72: #{net3_forward.1} parent=48 // pred_check
            _
          $region73: #{net3_forward.1} parent=48 // pred_check_branch
            %806 = sbr.rel target = $region75
          $region74: #{net3_forward.1} parent=48 // pred_region
            _
          $region75: #{net3_forward.1} parent=48 // pred_fallthru
            _
        $region49: #{net3_forward.1} parent=44 // pred_fallthru
          _
        // Predicated region
        $region50: #{net3_forward.1} parent=44 // pred_check
          _
        $region51: #{net3_forward.1} parent=44 // pred_check_branch
          %777 = sbr.rel target = $region53
        $region52: #{net3_forward.1} parent=44 // pred_region
          loop: start=0, step=1, limit=1
          $region54: #{net3_forward.1} parent=52 // loop_pre_header
            _
          $region55: #{net3_forward.1} parent=52 // loop_header
            %s780 = sphi 0, %s784
            %p781 = scmp.ge.s32.totalorder %s780, 1
            %s785 = sphi [#allocation2], [#allocation2]
            %s786 = sphi %s9, %s9
          $region56: #{net3_forward.1} parent=52 // loop_header_branch
            %783 = sbr.rel (%p781) target = $region60
          $region57: #{net3_forward.1} parent=52 // loop_body
            %v787 = vld [vmem:[%s785] sm:$0xff]
            %788 = vst [vmem:[%s786] sm:$0xff] %v787
            %v789 = vld [vmem:[%s785 + $0x10] sm:$0xff]
            %790 = vst [vmem:[%s786 + $0x8] sm:$0xff] %v789
          $region58: #{net3_forward.1} parent=52 // loop_footer
            %s784 = sadd.s32 1, %s780
          $region59: #{net3_forward.1} parent=52 // loop_footer_branch
            %779 = sbr.rel target = $region55
          $region60: #{net3_forward.1} parent=52 // loop_exit
            _
        $region53: #{net3_forward.1} parent=44 // pred_fallthru
          _
      $region45: #{net3_forward.1} parent=40 // pred_fallthru
        _
      %807 = vnop
    $region41: #{net3_forward.1} parent=1 // pred_fallthru
      _
    // Predicated region
    $region76: #{net3_forward.1} parent=1 // pred_check
      _
    $region77: #{net3_forward.1} parent=1 // pred_check_branch
      %809 = sbr.rel (0) target = $region79
    $region78: #{net3_forward.1} parent=1 // pred_region
      _
    $region79: #{net3_forward.1} parent=1 // pred_fallthru
      _

</llo_original>
